<compile_context>
chip_gen: v6e
topology: v6e:2x2x1
jax: 0.10.0
libtpu: 0.0.40
codegen_flags: <defaults>
</compile_context>

<pallas_src>
import functools
import math

import jax
import jax.numpy as jnp
from jax.experimental import pallas as pl
from jax.experimental.pallas import tpu as pltpu
import numpy as np


def _scaled_sinusoidal_kernel(scale_ref, fpk_ref, cbase_ref, sbase_ref, o_ref,
                              *, positions_per_tile):
    # scale_ref: SMEM (1,)                learnable scalar
    # fpk_ref:   VMEM (1, W)   f32        packed inv_freq, VMEM-resident (const index_map)
    # cbase_ref: VMEM (tr, W)  f32        cos(theta_base), VMEM-resident
    # sbase_ref: VMEM (tr, W)  f32        sin(theta_base), VMEM-resident
    # o_ref:     VMEM (tr, W)             lane-dense output tile
    base = (pl.program_id(0) * positions_per_tile).astype(jnp.float32)
    phase = base * fpk_ref[...]                      # (1, W)  tiny per-step work
    s = scale_ref[0]
    u = jnp.sin(phase) * s                           # scale folded into phase rows
    v = jnp.cos(phase) * s
    # out = scale * sin(base*f + theta_base) = cos(theta_base)*u + sin(theta_base)*v
    o_ref[...] = (cbase_ref[...] * u + sbase_ref[...] * v).astype(o_ref.dtype)


def _choose_tile_rows(num_rows, width, out_itemsize):
    """Largest tile (rows of the packed output) under a ~12 MiB VMEM budget."""
    budget = 12 * 1024 * 1024
    # out double-buffered (2*itemsize) + two f32 base tables (conservatively x2) = +16B
    bytes_per_row = width * (2 * out_itemsize + 16)
    t = max(1, budget // bytes_per_row)
    t = min(t, 1024, num_rows)
    if num_rows > 8:
        t = max(8, (t // 8) * 8)                     # sublane alignment
        if num_rows >= 16:
            # ensure >= 2 grid steps so v7x megacore splits work across both cores
            half_rows = ((-(-num_rows // 2)) + 7) // 8 * 8
            t = min(t, half_rows)
    return t


def scaled_sinusoidal_embedding(seq_len, inv_freq, scale, *, dtype=jnp.float32):
    """inv_freq: (dim//2,) f32, scale: (1,) f32 -> (seq_len, dim) embedding."""
    half_dim = int(inv_freq.shape[0])
    dim = 2 * half_dim
    inv_freq = inv_freq.astype(jnp.float32)
    scale = scale.astype(jnp.float32)

    # ---- lane packing: fold g consecutive positions into the lane axis if dim < 128
    g = 1
    if dim < 128 and (128 % dim == 0) and (seq_len % (128 // dim) == 0):
        g = 128 // dim
    W = g * dim
    num_rows = seq_len // g

    out_itemsize = jnp.dtype(dtype).itemsize
    tile_rows = _choose_tile_rows(num_rows, W, out_itemsize)
    grid_n = pl.cdiv(num_rows, tile_rows)
    positions_per_tile = tile_rows * g

    # ---- wrapper-side constant tables (DMA'd once, VMEM-resident across all steps)
    d_idx = jnp.arange(dim)
    f_dim = inv_freq[d_idx % half_dim]                                    # (dim,)
    quad = jnp.where(d_idx >= half_dim, jnp.float32(math.pi / 2), 0.0)    # (dim,)
    f_packed = jnp.tile(f_dim, g).reshape(1, W)                           # (1, W)
    quad_packed = jnp.tile(quad, g)                                       # (W,)
    r_packed = jnp.repeat(jnp.arange(g, dtype=jnp.float32), dim)          # (W,)
    p = jnp.arange(tile_rows, dtype=jnp.float32)                          # (tile_rows,)
    theta = (p[:, None] * g + r_packed[None, :]) * f_packed + quad_packed[None, :]
    cbase = jnp.cos(theta)                                                # (tile_rows, W)
    sbase = jnp.sin(theta)                                                # (tile_rows, W)

    cost = pl.CostEstimate(
        flops=int(3 * num_rows * W),
        transcendentals=int(2 * W * grid_n),
        bytes_accessed=int(num_rows * W * out_itemsize + 2 * tile_rows * W * 4),
    )

    out = pl.pallas_call(
        functools.partial(_scaled_sinusoidal_kernel,
                          positions_per_tile=positions_per_tile),
        out_shape=jax.ShapeDtypeStruct((num_rows, W), dtype),
        grid_spec=pltpu.PrefetchScalarGridSpec(
            num_scalar_prefetch=0,
            grid=(grid_n,),
            in_specs=[
                # scalar parameter -> SMEM (scalar path)
                pl.BlockSpec(memory_space=pltpu.MemorySpace.SMEM),
                # small constant tables -> VMEM-resident (constant index_map)
                pl.BlockSpec((1, W), lambda i: (0, 0)),
                pl.BlockSpec((tile_rows, W), lambda i: (0, 0)),
                pl.BlockSpec((tile_rows, W), lambda i: (0, 0)),
            ],
            out_specs=pl.BlockSpec((tile_rows, W), lambda i: (i, 0)),
        ),
        compiler_params=pltpu.CompilerParams(
            dimension_semantics=("parallel",)),
        cost_estimate=cost,
    )(scale, f_packed, cbase, sbase)

    # row-major reshape: layout-identical, free
    return out.reshape(seq_len, dim)


def scaled_sinusoidal_reference(seq_len, inv_freq, scale):
    """Plain-JAX reference mirroring the PyTorch forward (default pos path)."""
    pos = jnp.arange(seq_len, dtype=jnp.float32)
    emb = pos[:, None] * inv_freq[None, :]
    emb = jnp.concatenate([jnp.sin(emb), jnp.cos(emb)], axis=-1)
    return emb * scale


if __name__ == "__main__":
    THETA = 10000.0

    # ---- Test 1: small shape consistent with the module (batch=2, seq=8, hidden=32).
    B, SEQ, DIM = 2, 8, 32
    HALF = DIM // 2
    key = jax.random.PRNGKey(0)
    x = jax.random.normal(key, (B, SEQ, DIM), dtype=jnp.float32)  # only x.shape[1] used
    inv_freq = THETA ** (-(jnp.arange(HALF, dtype=jnp.float32) / HALF))
    scale = jnp.ones((1,), jnp.float32) * DIM ** (-0.5)

    out = jax.block_until_ready(scaled_sinusoidal_embedding(x.shape[1], inv_freq, scale))
    ref = jax.block_until_ready(scaled_sinusoidal_reference(SEQ, inv_freq, scale))
    assert out.shape == (SEQ, DIM)
    assert np.allclose(np.asarray(out), np.asarray(ref), atol=2e-5, rtol=1e-5), \
        "Pallas ScaledSinusoidalEmbedding kernel does not match reference (small shape)"

    # ---- Test 2: non-multiple seq_len + realistic dim (masked tail + lane-dense path).
    SEQ2, DIM2 = 385, 256
    HALF2 = DIM2 // 2
    inv_freq2 = THETA ** (-(jnp.arange(HALF2, dtype=jnp.float32) / HALF2))
    scale2 = jnp.ones((1,), jnp.float32) * DIM2 ** (-0.5)
    out2 = jax.block_until_ready(scaled_sinusoidal_embedding(SEQ2, inv_freq2, scale2))
    ref2 = jax.block_until_ready(scaled_sinusoidal_reference(SEQ2, inv_freq2, scale2))
    assert out2.shape == (SEQ2, DIM2)
    assert np.allclose(np.asarray(out2), np.asarray(ref2), atol=1e-4, rtol=1e-4), \
        "Pallas ScaledSinusoidalEmbedding kernel does not match reference (tail shape)"

    # ---- Test 3: bf16 output (math in f32, cast at the store).
    out3 = jax.block_until_ready(
        scaled_sinusoidal_embedding(SEQ2, inv_freq2, scale2, dtype=jnp.bfloat16))
    assert np.allclose(np.asarray(out3.astype(jnp.float32)), np.asarray(ref2),
                       atol=1e-2, rtol=1e-2), "bf16 output path mismatch"

    print("KERNEL_OK")
</pallas_src>

<mosaic_0001>
module attributes {stable_mosaic.version = 11 : i64} {
  func.func @_scaled_sinusoidal_kernel(%arg0: i32, %arg1: memref<1xf32, #tpu.memory_space<smem>>, %arg2: memref<1x128xf32, #tpu.memory_space<vmem>>, %arg3: memref<2x128xf32, #tpu.memory_space<vmem>>, %arg4: memref<2x128xf32, #tpu.memory_space<vmem>>, %arg5: memref<2x128xf32, #tpu.memory_space<vmem>>) attributes {dimension_semantics = [#tpu.dimension_semantics<parallel>], iteration_bounds = array<i64: 1>, scalar_prefetch = 0 : i64, scratch_operands = 0 : i64, tpu.core_type = #tpu.core_type<tc>, window_params = [{transform_indices = @transform_0, window_bounds = array<i64: 1>}, {pipeline_mode = #tpu.pipeline_mode<synchronous>, transform_indices = @transform_1, window_bounds = array<i64: 1, 128>}, {pipeline_mode = #tpu.pipeline_mode<synchronous>, transform_indices = @transform_2, window_bounds = array<i64: 2, 128>}, {pipeline_mode = #tpu.pipeline_mode<synchronous>, transform_indices = @transform_3, window_bounds = array<i64: 2, 128>}, {transform_indices = @transform_4, window_bounds = array<i64: 2, 128>}]} {
    %c8_i32 = arith.constant 8 : i32
    %0 = arith.muli %arg0, %c8_i32 : i32
    %1 = arith.sitofp %0 : i32 to f32
    %c0 = arith.constant 0 : index
    %c0_0 = arith.constant 0 : index
    %2 = vector.load %arg2[%c0, %c0_0] : memref<1x128xf32, #tpu.memory_space<vmem>>, vector<1x128xf32>
    %3 = vector.broadcast %1 : f32 to vector<1x128xf32>
    %4 = arith.mulf %3, %2 : vector<1x128xf32>
    %c0_1 = arith.constant 0 : index
    %5 = memref.load %arg1[%c0_1] : memref<1xf32, #tpu.memory_space<smem>>
    %6 = math.sin %4 : vector<1x128xf32>
    %7 = vector.broadcast %5 : f32 to vector<1x128xf32>
    %8 = arith.mulf %6, %7 : vector<1x128xf32>
    %9 = math.cos %4 : vector<1x128xf32>
    %10 = vector.broadcast %5 : f32 to vector<1x128xf32>
    %11 = arith.mulf %9, %10 : vector<1x128xf32>
    %c0_2 = arith.constant 0 : index
    %c0_3 = arith.constant 0 : index
    %12 = vector.load %arg3[%c0_2, %c0_3] : memref<2x128xf32, #tpu.memory_space<vmem>>, vector<2x128xf32>
    %13 = vector.broadcast %8 : vector<1x128xf32> to vector<2x128xf32>
    %14 = arith.mulf %12, %13 : vector<2x128xf32>
    %c0_4 = arith.constant 0 : index
    %c0_5 = arith.constant 0 : index
    %15 = vector.load %arg4[%c0_4, %c0_5] : memref<2x128xf32, #tpu.memory_space<vmem>>, vector<2x128xf32>
    %16 = vector.broadcast %11 : vector<1x128xf32> to vector<2x128xf32>
    %17 = arith.mulf %15, %16 : vector<2x128xf32>
    %18 = arith.addf %14, %17 : vector<2x128xf32>
    %c0_6 = arith.constant 0 : index
    %c0_7 = arith.constant 0 : index
    %19 = vector.load %arg5[%c0_6, %c0_7] : memref<2x128xf32, #tpu.memory_space<vmem>>, vector<2x128xf32>
    tpu.vector_store %arg5[%c0_6, %c0_7], %18 {strides = array<i32>} : memref<2x128xf32, #tpu.memory_space<vmem>>, vector<2x128xf32>,
    return
  }
  func.func @transform_0(%arg0: i32) -> i32 {
    %c0_i32 = arith.constant 0 : i32
    %c0_i32_0 = arith.constant 0 : i32
    return %c0_i32 : i32
  }
  func.func @transform_1(%arg0: i32) -> (i32, i32) {
    %c0_i32 = arith.constant 0 : i32
    %c0_i32_0 = arith.constant 0 : i32
    %c0_i32_1 = arith.constant 0 : i32
    return %c0_i32, %c0_i32_0 : i32, i32
  }
  func.func @transform_2(%arg0: i32) -> (i32, i32) {
    %c0_i32 = arith.constant 0 : i32
    %c0_i32_0 = arith.constant 0 : i32
    %c0_i32_1 = arith.constant 0 : i32
    return %c0_i32, %c0_i32_0 : i32, i32
  }
  func.func @transform_3(%arg0: i32) -> (i32, i32) {
    %c0_i32 = arith.constant 0 : i32
    %c0_i32_0 = arith.constant 0 : i32
    %c0_i32_1 = arith.constant 0 : i32
    return %c0_i32, %c0_i32_0 : i32, i32
  }
  func.func @transform_4(%arg0: i32) -> (i32, i32) {
    %c0_i32 = arith.constant 0 : i32
    %c0_i32_0 = arith.constant 0 : i32
    return %arg0, %c0_i32 : i32, i32
  }
}

</mosaic_0001>

<llo_original>
// kernel: tpu_custom_call.1
$region0: #{tpu_custom_call.1}
  #allocation0 [shape = 'u32[]', space=smem, size = 0x4, offset = 0x4, fixed_abs, tag = 'smem constant byte address 0x4 - core index']
  #allocation1 [shape = 'u32[144,128]{1,0:T(1,128)}', space=vmem, size = 0x12000, scoped, tag = 'internal scratch']
  #allocation2 [shape = 'f32[1]{0:T(128)S(6)}', space=smem, size = 0x200, scoped, tag = 'scoped memory for tpu_custom_call.1']
  %s0 = inlined_call_operand.<no memory space> [shape: f32[1], index: 0, kind: input, shape index: {}]
  %s1 = inlined_call_operand.vmem [shape: f32[1,128], index: 1, kind: input, shape index: {}]
  %s2 = inlined_call_operand.vmem [shape: f32[2,128], index: 2, kind: input, shape index: {}]
  %s3 = inlined_call_operand.vmem [shape: f32[2,128], index: 3, kind: input, shape index: {}]
  %s4 = inlined_call_operand.hbm [shape: f32[2,128], index: 4, kind: output, shape index: {}]
  %s5 = sld [smem:[#allocation0]]
  $region26: #{tpu_custom_call.1} parent=0
    _
  %s7 = ssub.s32 1, %s5
  %s8 = scalar_select 0, %s7, %s5
  %9 = sst [smem:[#allocation2]] %s0
  $region1: #{tpu_custom_call.1} parent=0
    #allocation3 [shape = 'u8[1024]{0}', space=vmem, size = 0x400, scoped, tag = 'output window, operand 0, single buffered']
    #allocation4 [shape = 's32[1]{0}', space=sflag, size = 0x4, scoped, tag = 'scoped memory for tpu_custom_call.1']
    %10 = vsyncpa [#allocation4], 0
    // Predicated region
    $region2: #{tpu_custom_call.1} parent=1 // pred_check
      _
    $region3: #{tpu_custom_call.1} parent=1 // pred_check_branch
      %12 = sbr.rel (0) target = $region5
    $region4: #{tpu_custom_call.1} parent=1 // pred_region
      _
    $region5: #{tpu_custom_call.1} parent=1 // pred_fallthru
      _
    // Predicated region
    $region6: #{tpu_custom_call.1} parent=1 // pred_check
      _
    $region7: #{tpu_custom_call.1} parent=1 // pred_check_branch
      %14 = sbr.rel (0) target = $region9
    $region8: #{tpu_custom_call.1} parent=1 // pred_region
      _
    $region9: #{tpu_custom_call.1} parent=1 // pred_fallthru
      _
    // Predicated region
    $region10: #{tpu_custom_call.1} parent=1 // pred_check
      _
    $region11: #{tpu_custom_call.1} parent=1 // pred_check_branch
      %16 = sbr.rel (0) target = $region13
    $region12: #{tpu_custom_call.1} parent=1 // pred_region
      _
    $region13: #{tpu_custom_call.1} parent=1 // pred_fallthru
      _
    // Predicated region
    $region14: #{tpu_custom_call.1} parent=1 // pred_check
      _
    $region15: #{tpu_custom_call.1} parent=1 // pred_check_branch
      %18 = sbr.rel (0) target = $region17
    $region16: #{tpu_custom_call.1} parent=1 // pred_region
      _
    $region17: #{tpu_custom_call.1} parent=1 // pred_fallthru
      _
    %s19 = smul.u32 0, 8
    %s20 = scvt.s32.f32 %s19
    %v21 = vld [vmem:[%s1] sm:$0x1]
    %v22 = vstv %s20
    %v23 = vmul.f32 %v22, %v21
    %s24 = sld [smem:[#allocation2]]
    %v25 = vand.u32 2147483647, %v23
    %vm26 = vcmp.le.f32.partialorder %v25, 0.7853982
    %vm27 = vcmp.lt.s32.totalorder %v23, 0
    %v28 = vand.u32 %v23, 2139095040
    %v29 = vshrl.u32 %v28, 23
    %v30 = vsub.s32 %v29, 127
    %v31 = vand.u32 2147483647, %v23
    %v32 = vand.u32 %v31, 8388607
    %v33 = vor.u32 %v32, 8388608
    %v34 = vsub.s32 0, %v33
    %v35 = vadd.s32 %v30, 1
    %vm36 = vcmp.gt.s32.totalorder %v35, 0
    %v37 = vsel %vm36, %v35, 0
    %v38 = vshrl.u32 %v37, 5
    %v39 = vand.u32 %v37, 31
    %v40 = vsub.s32 32, %v39
    %v41 = vshrl.u32 683565275, %v40
    %v42 = vshll.u32 683565275, %v39
    %v43 = vshrl.u32 2475754826, %v40
    %v44 = vor.u32 %v42, %v43
    %v45 = vshll.u32 2475754826, %v39
    %v46 = vshrl.u32 2131351028, %v40
    %v47 = vor.u32 %v45, %v46
    %v48 = vshll.u32 2131351028, %v39
    %v49 = vshrl.u32 2102212464, %v40
    %v50 = vor.u32 %v48, %v49
    %v51 = vshll.u32 2102212464, %v39
    %v52 = vshrl.u32 920167782, %v40
    %v53 = vor.u32 %v51, %v52
    %v54 = vshll.u32 920167782, %v39
    %v55 = vshrl.u32 1326507024, %v40
    %v56 = vor.u32 %v54, %v55
    %vm57 = vcmp.lt.s32.totalorder %v38, 1
    %vm58 = vcmp.lt.s32.totalorder %v38, 2
    %vm59 = vcmp.lt.s32.totalorder %v38, 3
    %vm60 = vcmp.lt.s32.totalorder %v38, 4
    %v61 = vsel %vm57, %v41, %v44
    %v62 = vsel %vm60, %v50, 2102212464
    %v63 = vsel %vm59, %v47, %v62
    %v64 = vsel %vm58, %v61, %v63
    %v65 = vsel %vm57, %v44, %v47
    %v66 = vsel %vm60, %v53, 920167782
    %v67 = vsel %vm59, %v50, %v66
    %v68 = vsel %vm58, %v65, %v67
    %v69 = vsel %vm57, %v47, %v50
    %v70 = vsel %vm60, %v56, 1326507024
    %v71 = vsel %vm59, %v53, %v70
    %v72 = vsel %vm58, %v69, %v71
    %v73 = vshll.u32 %v33, 8
    %v74 = vmul.u32.u64.compose %v73, %v72
    %v75 = vextract.low.u32 %v74
    %v76 = vextract.high.u32 %v74
    %v77 = vmul.u32.u64.compose %v73, %v68
    %v78 = vextract.low.u32 %v77
    %v79 = vextract.high.u32 %v77
    %v80 = vmul.u32 %v73, %v64
    %v81 = vadd.s32 %v76, %v78
    %vm82 = vc.u32 %v76, %v78
    %v83 = vadd.s32 %v79, 1
    %v84 = vsel %vm82, %v83, %v79
    %v85 = vadd.s32 %v80, %v84
    %v86 = vadd.s32 %v85, 536870912
    %v87 = vshrl.u32 %v86, 30
    %v88 = vshll.u32 %v87, 30
    %v89 = vsub.s32 %v85, %v88
    %vm90 = vcmp.lt.s32.totalorder %v89, 0
    %v91 = vsub.s32 0, %v89
    %v92 = vsel %vm90, %v91, %v89
    %v93 = vclz %v92
    %v94 = vsub.s32 %v93, 2
    %vm95 = vcmp.gt.s32.totalorder 0, %v94
    %v96 = vsel %vm95, 0, %v94
    %v97 = vsub.s32 32, %v96
    %v98 = vshll.u32 %v89, %v96
    %v99 = vshrl.u32 %v81, %v97
    %v100 = vor.u32 %v98, %v99
    %v101 = vsub.s32 4294967266, %v96
    %v102 = vadd.s32 %v101, 127
    %v103 = vshll.u32 %v102, 23
    %v104 = vor.u32 4788187, %v103
    %v105 = vand.u32 2147483647, %v104
    %v107 = vcvt.s32.f32 %v100
    %v108 = vmul.f32 %v107, %v105
    %v109 = vxor.u32 %v108, 2147483648
    %v110 = vsel %vm27, %v109, %v108
    %v111 = vsub.s32 4, %v87
    %v112 = vsel %vm27, %v111, %v87
    %v113 = vsel %vm26, %v23, %v110
    %v114 = vsel %vm26, 0, %v112
    %v115 = vcosq.f32.pop %v113
    %v116 = vsinq.f32.pop %v113
    %vm117 = vweird.f32 %v23
    %v118 = vadd.s32 %v114, 3
    %v119 = vand.u32 %v118, 3
    %vm120 = vcmp.lt.s32.totalorder %v119, 2
    %vm121 = vcmp.eq.s32.totalorder %v119, 0
    %v122 = vxor.u32 %v116, 2147483648
    %v123 = vsel %vm121, %v115, %v122
    %vm124 = vcmp.eq.s32.totalorder %v119, 2
    %v125 = vxor.u32 %v115, 2147483648
    %v126 = vsel %vm124, %v125, %v116
    %v127 = vsel %vm120, %v123, %v126
    %v128 = vsel %vm117, nan, %v127
    %v129 = vstv %s24
    %v130 = vmul.f32 %v128, %v129
    %v131 = vand.u32 2147483647, %v23
    %vm132 = vcmp.le.f32.partialorder %v131, 0.7853982
    %vm133 = vcmp.lt.s32.totalorder %v23, 0
    %v134 = vand.u32 %v23, 2139095040
    %v135 = vshrl.u32 %v134, 23
    %v136 = vsub.s32 %v135, 127
    %v137 = vand.u32 2147483647, %v23
    %v138 = vand.u32 %v137, 8388607
    %v139 = vor.u32 %v138, 8388608
    %v140 = vsub.s32 0, %v139
    %v141 = vadd.s32 %v136, 1
    %vm142 = vcmp.gt.s32.totalorder %v141, 0
    %v143 = vsel %vm142, %v141, 0
    %v144 = vshrl.u32 %v143, 5
    %v145 = vand.u32 %v143, 31
    %v146 = vsub.s32 32, %v145
    %v147 = vshrl.u32 683565275, %v146
    %v148 = vshll.u32 683565275, %v145
    %v149 = vshrl.u32 2475754826, %v146
    %v150 = vor.u32 %v148, %v149
    %v151 = vshll.u32 2475754826, %v145
    %v152 = vshrl.u32 2131351028, %v146
    %v153 = vor.u32 %v151, %v152
    %v154 = vshll.u32 2131351028, %v145
    %v155 = vshrl.u32 2102212464, %v146
    %v156 = vor.u32 %v154, %v155
    %v157 = vshll.u32 2102212464, %v145
    %v158 = vshrl.u32 920167782, %v146
    %v159 = vor.u32 %v157, %v158
    %v160 = vshll.u32 920167782, %v145
    %v161 = vshrl.u32 1326507024, %v146
    %v162 = vor.u32 %v160, %v161
    %vm163 = vcmp.lt.s32.totalorder %v144, 1
    %vm164 = vcmp.lt.s32.totalorder %v144, 2
    %vm165 = vcmp.lt.s32.totalorder %v144, 3
    %vm166 = vcmp.lt.s32.totalorder %v144, 4
    %v167 = vsel %vm163, %v147, %v150
    %v168 = vsel %vm166, %v156, 2102212464
    %v169 = vsel %vm165, %v153, %v168
    %v170 = vsel %vm164, %v167, %v169
    %v171 = vsel %vm163, %v150, %v153
    %v172 = vsel %vm166, %v159, 920167782
    %v173 = vsel %vm165, %v156, %v172
    %v174 = vsel %vm164, %v171, %v173
    %v175 = vsel %vm163, %v153, %v156
    %v176 = vsel %vm166, %v162, 1326507024
    %v177 = vsel %vm165, %v159, %v176
    %v178 = vsel %vm164, %v175, %v177
    %v179 = vshll.u32 %v139, 8
    %v180 = vmul.u32.u64.compose %v179, %v178
    %v181 = vextract.low.u32 %v180
    %v182 = vextract.high.u32 %v180
    %v183 = vmul.u32.u64.compose %v179, %v174
    %v184 = vextract.low.u32 %v183
    %v185 = vextract.high.u32 %v183
    %v186 = vmul.u32 %v179, %v170
    %v187 = vadd.s32 %v182, %v184
    %vm188 = vc.u32 %v182, %v184
    %v189 = vadd.s32 %v185, 1
    %v190 = vsel %vm188, %v189, %v185
    %v191 = vadd.s32 %v186, %v190
    %v192 = vadd.s32 %v191, 536870912
    %v193 = vshrl.u32 %v192, 30
    %v194 = vshll.u32 %v193, 30
    %v195 = vsub.s32 %v191, %v194
    %vm196 = vcmp.lt.s32.totalorder %v195, 0
    %v197 = vsub.s32 0, %v195
    %v198 = vsel %vm196, %v197, %v195
    %v199 = vclz %v198
    %v200 = vsub.s32 %v199, 2
    %vm201 = vcmp.gt.s32.totalorder 0, %v200
    %v202 = vsel %vm201, 0, %v200
    %v203 = vsub.s32 32, %v202
    %v204 = vshll.u32 %v195, %v202
    %v205 = vshrl.u32 %v187, %v203
    %v206 = vor.u32 %v204, %v205
    %v207 = vsub.s32 4294967266, %v202
    %v208 = vadd.s32 %v207, 127
    %v209 = vshll.u32 %v208, 23
    %v210 = vor.u32 4788187, %v209
    %v211 = vand.u32 2147483647, %v210
    %v213 = vcvt.s32.f32 %v206
    %v214 = vmul.f32 %v213, %v211
    %v215 = vxor.u32 %v214, 2147483648
    %v216 = vsel %vm133, %v215, %v214
    %v217 = vsub.s32 4, %v193
    %v218 = vsel %vm133, %v217, %v193
    %v219 = vsel %vm132, %v23, %v216
    %v220 = vsel %vm132, 0, %v218
    %v221 = vcosq.f32.pop %v219
    %v222 = vsinq.f32.pop %v219
    %vm223 = vweird.f32 %v23
    %v224 = vand.u32 %v220, 3
    %vm225 = vcmp.lt.s32.totalorder %v224, 2
    %vm226 = vcmp.eq.s32.totalorder %v224, 0
    %v227 = vxor.u32 %v222, 2147483648
    %v228 = vsel %vm226, %v221, %v227
    %vm229 = vcmp.eq.s32.totalorder %v224, 2
    %v230 = vxor.u32 %v221, 2147483648
    %v231 = vsel %vm229, %v230, %v222
    %v232 = vsel %vm225, %v228, %v231
    %v233 = vsel %vm223, nan, %v232
    %v234 = vmul.f32 %v233, %v129
    %v235 = vld [vmem:[%s2] sm:$0x3]
    %v237 = vlaneseq
    %v238 = vshrl.u32 %v237, 7
    %v239 = vsub.s32 0, %v238
    %v240 = vrot.slane %v130, %v239
    %v242 = vmul.f32 %v235, %v240
    %v243 = vld [vmem:[%s3] sm:$0x3]
    %v245 = vlaneseq
    %v246 = vshrl.u32 %v245, 7
    %v247 = vsub.s32 0, %v246
    %v248 = vrot.slane %v234, %v247
    %v250 = vmul.f32 %v243, %v248
    %v251 = vadd.f32 %v242, %v250
    %252 = vst [vmem:[#allocation3] sm:$0x3] %v251
    // Predicated region
    $region18: #{tpu_custom_call.1} parent=1 // pred_check
      _
    $region19: #{tpu_custom_call.1} parent=1 // pred_check_branch
      %254 = sbr.rel (0) target = $region21
    $region20: #{tpu_custom_call.1} parent=1 // pred_region
      %s256 = ssub.s32 32, 32
      %257 = vsyncadd [#allocation4], %s256
      %s259 = sshll.u32 [#allocation3], 4
      %s260 = int_to_ptr.vmem [resolvable:$true] %s259
      %262 = dma.vmem_to_hbm [thread:$0]  %s260, 32, %s4, [#allocation4]
    $region21: #{tpu_custom_call.1} parent=1 // pred_fallthru
      _
    // Predicated region
    $region22: #{tpu_custom_call.1} parent=1 // pred_check
      _
    $region23: #{tpu_custom_call.1} parent=1 // pred_check_branch
      %264 = sbr.rel (0) target = $region25
    $region24: #{tpu_custom_call.1} parent=1 // pred_region
      %265 = dma.done [#allocation4], 32
    $region25: #{tpu_custom_call.1} parent=1 // pred_fallthru
      _
    %266 = vsyncpa [#allocation4], 1

</llo_original>
